<compile_context>
chip_gen: v6e
topology: v6e:2x2x1
jax: 0.10.0
libtpu: 0.0.40
codegen_flags: <defaults>
</compile_context>

<pallas_src>
import functools

import jax
import jax.numpy as jnp
from jax.experimental import pallas as pl
from jax.experimental.pallas import tpu as pltpu


def _round_up(x, m):
    return ((x + m - 1) // m) * m


def _vmem_capacity_bytes():
    # Narrow feature probe (hardware info only, NOT a kernel-error catch-all): use the part's
    # real VMEM size if this JAX exposes it, else assume the smallest current part (v7x, 64 MiB).
    try:
        info = pltpu.get_tpu_info()
        cap = getattr(info, "vmem_capacity_bytes", None)
        if cap:
            return int(cap)
    except Exception:
        pass
    return 64 * 1024 * 1024


def _budget_and_limit():
    cap = _vmem_capacity_bytes()
    if cap >= 100 * 1024 * 1024:
        # 128 MiB parts (v5e / v6e): use most of it so mid-size samples stay on the 1-read path.
        return 96 * 1024 * 1024, 108 * 1024 * 1024
    # 64 MiB parts (v7x): leave headroom for Mosaic internal scratch.
    return 40 * 1024 * 1024, 48 * 1024 * 1024


# ---------------------------------------------------------------------------------------------
# Kernels
# ---------------------------------------------------------------------------------------------
def _fused_kernel(x_ref, w1_ref, b1_ref, w2_ref, b2_ref, o_ref, *, inv_hw):
    # x_ref block: (B, C, HW) in the input dtype; w*_ref: (C_in, C_out) f32; b*_ref: (1, C) f32.
    x = x_ref[...]                                               # (B, C, HW), native dtype
    # Global average pool over the spatial lanes (f32 accumulation).
    pooled = jnp.sum(x, axis=-1, dtype=jnp.float32) * inv_hw     # (B, C) f32
    # 1x1 conv #1 + ReLU   (weights pre-transposed -> pooled @ W1^T)
    h = jnp.dot(pooled, w1_ref[...], preferred_element_type=jnp.float32) + b1_ref[...]
    h = jnp.maximum(h, 0.0)
    # 1x1 conv #2 + Sigmoid
    g = jnp.dot(h, w2_ref[...], preferred_element_type=jnp.float32) + b2_ref[...]
    gate = jax.nn.sigmoid(g).astype(x.dtype)                     # (B, C), native dtype
    # Elementwise scale in the native dtype (no full-tile f32 copy of x).
    o_ref[...] = x * gate[:, :, None]


def _pool_kernel(x_ref, sum_ref, *, hw, t_hw):
    # Accumulate per-(sample, channel) spatial sums over HW tiles (reduction axis is grid axis 1).
    hwi = pl.program_id(1)

    @pl.when(hwi == 0)
    def _():
        sum_ref[...] = jnp.zeros_like(sum_ref)

    x = x_ref[...]                                               # (1, C, t_hw), native dtype
    if hw % t_hw != 0:
        # Mask the out-of-bounds lane tail of the last HW tile (OOB reads are unspecified).
        lane = jax.lax.broadcasted_iota(jnp.int32, x.shape, dimension=2)
        x = jnp.where(hwi * t_hw + lane < hw, x, jnp.zeros_like(x))
    sum_ref[...] += jnp.sum(x, axis=-1, keepdims=True, dtype=jnp.float32)


def _scale_kernel(x_ref, g_ref, o_ref):
    # x_ref: (1, C, t_hw); g_ref: (1, C, 1) -> lane broadcast multiply.
    o_ref[...] = x_ref[...] * g_ref[...]


# ---------------------------------------------------------------------------------------------
# Wrapper
# ---------------------------------------------------------------------------------------------
def channel_atten(x_nchw, w1, b1, w2, b2, *, block_samples=None, hw_tile=None,
                  force_two_phase=False):
    """ChannelAtten forward.  x: (N,C,H,W); w1,w2: (C,C) 1x1-conv weights (out,in); b1,b2: (C,)."""
    N, C, H, W = x_nchw.shape
    HW = H * W
    x_flat = x_nchw.reshape(N, C, HW)          # merges trailing dims -> no HBM copy
    dtype = x_flat.dtype

    # Lane-friendly parameter layouts: (C_in, C_out) weights, (1, C) biases.
    w1t = jnp.asarray(w1, jnp.float32).T
    w2t = jnp.asarray(w2, jnp.float32).T
    b1r = jnp.asarray(b1, jnp.float32).reshape(1, C)
    b2r = jnp.asarray(b2, jnp.float32).reshape(1, C)

    budget, vmem_limit = _budget_and_limit()

    xbytes = jnp.dtype(dtype).itemsize
    c_sub = _round_up(C, 8)                    # C maps to sublanes in VMEM
    hw_lane = _round_up(HW, 128)               # internal lane padding of the last dim
    per_sample_1buf = 2 * c_sub * hw_lane * xbytes          # x block + out block, one buffer
    per_sample = 2 * per_sample_1buf                         # double-buffered by the pipeline
    c_lane = _round_up(C, 128)
    resident = 2 * 2 * (c_sub * c_lane + 8 * c_lane) * 4     # W1,W2,b1,b2 (f32, double-buffered)

    single_pass_fits = (resident + per_sample) <= budget
    use_two_phase = bool(force_two_phase) or not single_pass_fits

    if not use_two_phase:
        # ---- single pass: 1 read + 1 write of x, gate math fused in-kernel ------------------
        b_fit = max(1, (budget - resident) // per_sample)
        b_cap = max(1, N // 4)                 # >= 4 grid steps -> >= 2 per TC on dual-TC parts
        if block_samples is not None:
            B = int(block_samples)
        else:
            B = int(min(b_fit, b_cap, N))
        B = max(1, min(B, N))
        grid_n = pl.cdiv(N, B)                 # ragged last block: OOB rows masked on write

        cost = pl.CostEstimate(
            flops=2 * N * C * HW + 4 * N * C * C,
            transcendentals=2 * N * C,
            bytes_accessed=2 * N * C * HW * xbytes + 2 * C * C * 4,
        )
        out_flat = pl.pallas_call(
            functools.partial(_fused_kernel, inv_hw=1.0 / float(HW)),
            out_shape=jax.ShapeDtypeStruct((N, C, HW), dtype),
            grid_spec=pltpu.PrefetchScalarGridSpec(
                num_scalar_prefetch=0,
                grid=(grid_n,),
                in_specs=[
                    pl.BlockSpec((B, C, HW), lambda n: (n, 0, 0)),   # x (B samples per step)
                    pl.BlockSpec((C, C), lambda n: (0, 0)),          # W1^T
                    pl.BlockSpec((1, C), lambda n: (0, 0)),          # b1 (lane-major)
                    pl.BlockSpec((C, C), lambda n: (0, 0)),          # W2^T
                    pl.BlockSpec((1, C), lambda n: (0, 0)),          # b2 (lane-major)
                ],
                out_specs=pl.BlockSpec((B, C, HW), lambda n: (n, 0, 0)),
            ),
            compiler_params=pltpu.CompilerParams(
                dimension_semantics=("parallel",),
                vmem_limit_bytes=vmem_limit,
            ),
            cost_estimate=cost,
        )(x_flat, w1t, b1r, w2t, b2r)
        return out_flat.reshape(N, C, H, W)

    # ---- two-phase HW-tiled path (oversized samples): 2 reads + 1 write of x ----------------
    if hw_tile is not None:
        t_hw = max(128, _round_up(int(hw_tile), 128))
    else:
        # The scale pass is the tighter one: x-in + out, double-buffered.
        t_fit = max(128, (budget // (4 * c_sub * xbytes)) // 128 * 128)
        t_hw = min(hw_lane, t_fit)
    grid_hw = pl.cdiv(HW, t_hw)

    # Pass 1: per-(sample, channel) spatial sums.
    pool_cost = pl.CostEstimate(
        flops=N * C * HW,
        transcendentals=0,
        bytes_accessed=N * C * HW * xbytes + N * C * 4,
    )
    pooled = pl.pallas_call(
        functools.partial(_pool_kernel, hw=HW, t_hw=t_hw),
        out_shape=jax.ShapeDtypeStruct((N, C, 1), jnp.float32),
        grid_spec=pltpu.PrefetchScalarGridSpec(
            num_scalar_prefetch=0,
            grid=(N, grid_hw),
            in_specs=[pl.BlockSpec((1, C, t_hw), lambda n, h: (n, 0, h))],
            out_specs=pl.BlockSpec((1, C, 1), lambda n, h: (n, 0, 0)),   # resident accumulator
        ),
        compiler_params=pltpu.CompilerParams(
            dimension_semantics=("parallel", "arbitrary"),
            vmem_limit_bytes=vmem_limit,
        ),
        cost_estimate=pool_cost,
    )(x_flat)

    # Gate math on the tiny (N, C) pooled tensor: plain XLA (negligible vs. the x streams).
    pooled2d = pooled[:, :, 0] * (1.0 / float(HW))
    h = jnp.maximum(pooled2d @ w1t + b1r, 0.0)
    gate = jax.nn.sigmoid(h @ w2t + b2r).astype(dtype)[:, :, None]       # (N, C, 1)

    # Pass 2: stream x again and apply the gate.
    scale_cost = pl.CostEstimate(
        flops=N * C * HW,
        transcendentals=0,
        bytes_accessed=2 * N * C * HW * xbytes + N * C * xbytes,
    )
    out_flat = pl.pallas_call(
        _scale_kernel,
        out_shape=jax.ShapeDtypeStruct((N, C, HW), dtype),
        grid_spec=pltpu.PrefetchScalarGridSpec(
            num_scalar_prefetch=0,
            grid=(N, grid_hw),
            in_specs=[
                pl.BlockSpec((1, C, t_hw), lambda n, h: (n, 0, h)),      # x
                pl.BlockSpec((1, C, 1), lambda n, h: (n, 0, 0)),         # gate
            ],
            out_specs=pl.BlockSpec((1, C, t_hw), lambda n, h: (n, 0, h)),
        ),
        compiler_params=pltpu.CompilerParams(
            dimension_semantics=("parallel", "parallel"),
            vmem_limit_bytes=vmem_limit,
        ),
        cost_estimate=scale_cost,
    )(x_flat, gate)
    return out_flat.reshape(N, C, H, W)


def channel_atten_ref(x, w1, b1, w2, b2):
    # Pure-JAX reference (matches PyTorch ChannelAtten.forward).
    pooled = jnp.mean(x.astype(jnp.float32), axis=(2, 3))                # (N, C)
    h = jnp.maximum(pooled @ jnp.asarray(w1, jnp.float32).T + b1, 0.0)
    g = jax.nn.sigmoid(h @ jnp.asarray(w2, jnp.float32).T + b2)
    return x * g.astype(x.dtype)[:, :, None, None]


if __name__ == "__main__":
    key = jax.random.PRNGKey(0)

    def make_case(case_key, N, C, H, W):
        k_x, k_w1, k_b1, k_w2, k_b2 = jax.random.split(case_key, 5)
        x = jax.random.normal(k_x, (N, C, H, W), dtype=jnp.float32)
        w1 = jax.random.normal(k_w1, (C, C), dtype=jnp.float32) * 0.1
        b1 = jax.random.normal(k_b1, (C,), dtype=jnp.float32) * 0.1
        w2 = jax.random.normal(k_w2, (C, C), dtype=jnp.float32) * 0.1
        b2 = jax.random.normal(k_b2, (C,), dtype=jnp.float32) * 0.1
        return x, w1, b1, w2, b2

    def check(args, **kw):
        x, w1, b1, w2, b2 = args
        out = jax.block_until_ready(channel_atten(x, w1, b1, w2, b2, **kw))
        ref = channel_atten_ref(x, w1, b1, w2, b2)
        assert out.shape == x.shape
        assert jnp.allclose(out, ref, atol=1e-5, rtol=1e-5), "mismatch vs reference"

    k1, k2, k3, k4 = jax.random.split(key, 4)
    # Fused single-pass path, lane-aligned HW (16*16 = 256).
    check(make_case(k1, 2, 4, 16, 16))
    # Fused single-pass path, unaligned HW (7*7 = 49) -> masked tail stores, no wrapper padding.
    check(make_case(k2, 3, 8, 7, 7))
    # Ragged cdiv grid along N (5 samples, 2 per block -> masked partial last block).
    check(make_case(k3, 5, 8, 9, 9), block_samples=2)
    # Two-phase HW-tiled path (forced), HW = 144 -> two 128-lane tiles with a masked tail.
    check(make_case(k4, 2, 8, 12, 12), force_two_phase=True, hw_tile=128)

    print("KERNEL_OK")
</pallas_src>

<mosaic_0001>
module attributes {stable_mosaic.version = 11 : i64} {
  func.func @_fused_kernel(%arg0: i32, %arg1: memref<1x4x256xf32, #tpu.memory_space<vmem>>, %arg2: memref<4x4xf32, #tpu.memory_space<vmem>>, %arg3: memref<1x4xf32, #tpu.memory_space<vmem>>, %arg4: memref<4x4xf32, #tpu.memory_space<vmem>>, %arg5: memref<1x4xf32, #tpu.memory_space<vmem>>, %arg6: memref<1x4x256xf32, #tpu.memory_space<vmem>>) attributes {dimension_semantics = [#tpu.dimension_semantics<parallel>], iteration_bounds = array<i64: 2>, scalar_prefetch = 0 : i64, scratch_operands = 0 : i64, tpu.core_type = #tpu.core_type<tc>, window_params = [{transform_indices = @transform_0, window_bounds = array<i64: 1, 4, 256>}, {pipeline_mode = #tpu.pipeline_mode<synchronous>, transform_indices = @transform_1, window_bounds = array<i64: 4, 4>}, {pipeline_mode = #tpu.pipeline_mode<synchronous>, transform_indices = @transform_2, window_bounds = array<i64: 1, 4>}, {pipeline_mode = #tpu.pipeline_mode<synchronous>, transform_indices = @transform_3, window_bounds = array<i64: 4, 4>}, {pipeline_mode = #tpu.pipeline_mode<synchronous>, transform_indices = @transform_4, window_bounds = array<i64: 1, 4>}, {transform_indices = @transform_5, window_bounds = array<i64: 1, 4, 256>}]} {
    %c0 = arith.constant 0 : index
    %c0_0 = arith.constant 0 : index
    %c0_1 = arith.constant 0 : index
    %0 = vector.load %arg1[%c0, %c0_0, %c0_1] : memref<1x4x256xf32, #tpu.memory_space<vmem>>, vector<1x4x256xf32>
    %cst = arith.constant dense<0.000000e+00> : vector<1x4xf32>
    %1 = vector.multi_reduction <add>, %0, %cst [2] : vector<1x4x256xf32> to vector<1x4xf32>
    %cst_2 = arith.constant 3.906250e-03 : f32
    %2 = vector.broadcast %cst_2 : f32 to vector<1x4xf32>
    %3 = arith.mulf %1, %2 : vector<1x4xf32>
    %c0_3 = arith.constant 0 : index
    %c0_4 = arith.constant 0 : index
    %4 = vector.load %arg2[%c0_3, %c0_4] : memref<4x4xf32, #tpu.memory_space<vmem>>, vector<4x4xf32>
    %cst_5 = arith.constant dense<0.000000e+00> : vector<1x4xf32>
    %5 = tpu.matmul %3, %4, %cst_5 {dimension_numbers = #tpu.dot_dimension_numbers<[1], [0], [0], [1], [0, 0, 1, 1], [], []>} : vector<1x4xf32>, vector<4x4xf32>, vector<1x4xf32> -> vector<1x4xf32>
    %c0_6 = arith.constant 0 : index
    %c0_7 = arith.constant 0 : index
    %6 = vector.load %arg3[%c0_6, %c0_7] : memref<1x4xf32, #tpu.memory_space<vmem>>, vector<1x4xf32>
    %7 = arith.addf %5, %6 : vector<1x4xf32>
    %cst_8 = arith.constant 0.000000e+00 : f32
    %8 = vector.broadcast %cst_8 : f32 to vector<1x4xf32>
    %9 = arith.maximumf %7, %8 : vector<1x4xf32>
    %c0_9 = arith.constant 0 : index
    %c0_10 = arith.constant 0 : index
    %10 = vector.load %arg4[%c0_9, %c0_10] : memref<4x4xf32, #tpu.memory_space<vmem>>, vector<4x4xf32>
    %cst_11 = arith.constant dense<0.000000e+00> : vector<1x4xf32>
    %11 = tpu.matmul %9, %10, %cst_11 {dimension_numbers = #tpu.dot_dimension_numbers<[1], [0], [0], [1], [0, 0, 1, 1], [], []>} : vector<1x4xf32>, vector<4x4xf32>, vector<1x4xf32> -> vector<1x4xf32>
    %c0_12 = arith.constant 0 : index
    %c0_13 = arith.constant 0 : index
    %12 = vector.load %arg5[%c0_12, %c0_13] : memref<1x4xf32, #tpu.memory_space<vmem>>, vector<1x4xf32>
    %13 = arith.addf %11, %12 : vector<1x4xf32>
    %14 = arith.negf %13 : vector<1x4xf32>
    %15 = math.exp %14 : vector<1x4xf32>
    %cst_14 = arith.constant 1.000000e+00 : f32
    %16 = vector.broadcast %cst_14 : f32 to vector<1x4xf32>
    %17 = arith.addf %16, %15 : vector<1x4xf32>
    %18 = arith.divf %16, %17 : vector<1x4xf32>
    %19 = vector.shape_cast %18 : vector<1x4xf32> to vector<1x4x1xf32>
    %20 = vector.broadcast %19 : vector<1x4x1xf32> to vector<1x4x256xf32>
    %21 = arith.mulf %0, %20 : vector<1x4x256xf32>
    %c0_15 = arith.constant 0 : index
    %c0_16 = arith.constant 0 : index
    %c0_17 = arith.constant 0 : index
    %22 = vector.load %arg6[%c0_15, %c0_16, %c0_17] : memref<1x4x256xf32, #tpu.memory_space<vmem>>, vector<1x4x256xf32>
    tpu.vector_store %arg6[%c0_15, %c0_16, %c0_17], %21 {strides = array<i32>} : memref<1x4x256xf32, #tpu.memory_space<vmem>>, vector<1x4x256xf32>,
    return
  }
  func.func @transform_0(%arg0: i32) -> (i32, i32, i32) {
    %c0_i32 = arith.constant 0 : i32
    %c0_i32_0 = arith.constant 0 : i32
    %c0_i32_1 = arith.constant 0 : i32
    return %arg0, %c0_i32, %c0_i32_0 : i32, i32, i32
  }
  func.func @transform_1(%arg0: i32) -> (i32, i32) {
    %c0_i32 = arith.constant 0 : i32
    %c0_i32_0 = arith.constant 0 : i32
    %c0_i32_1 = arith.constant 0 : i32
    return %c0_i32, %c0_i32_0 : i32, i32
  }
  func.func @transform_2(%arg0: i32) -> (i32, i32) {
    %c0_i32 = arith.constant 0 : i32
    %c0_i32_0 = arith.constant 0 : i32
    %c0_i32_1 = arith.constant 0 : i32
    return %c0_i32, %c0_i32_0 : i32, i32
  }
  func.func @transform_3(%arg0: i32) -> (i32, i32) {
    %c0_i32 = arith.constant 0 : i32
    %c0_i32_0 = arith.constant 0 : i32
    %c0_i32_1 = arith.constant 0 : i32
    return %c0_i32, %c0_i32_0 : i32, i32
  }
  func.func @transform_4(%arg0: i32) -> (i32, i32) {
    %c0_i32 = arith.constant 0 : i32
    %c0_i32_0 = arith.constant 0 : i32
    %c0_i32_1 = arith.constant 0 : i32
    return %c0_i32, %c0_i32_0 : i32, i32
  }
  func.func @transform_5(%arg0: i32) -> (i32, i32, i32) {
    %c0_i32 = arith.constant 0 : i32
    %c0_i32_0 = arith.constant 0 : i32
    %c0_i32_1 = arith.constant 0 : i32
    return %arg0, %c0_i32, %c0_i32_0 : i32, i32, i32
  }
}

</mosaic_0001>

<llo_original>
// kernel: tpu_custom_call.1
$region0: #{tpu_custom_call.1}
  #allocation0 [shape = 'u32[]', space=smem, size = 0x4, offset = 0x4, fixed_abs, tag = 'smem constant byte address 0x4 - core index']
  #allocation1 [shape = 'u32[144,128]{1,0:T(1,128)}', space=vmem, size = 0x12000, scoped, tag = 'internal scratch']
  %s0 = inlined_call_operand.hbm [shape: f32[2,4,256], index: 0, kind: input, shape index: {}]
  %s1 = inlined_call_operand.hbm [shape: f32[4,4], index: 1, kind: input, shape index: {}]
  %s2 = inlined_call_operand.vmem [shape: f32[1,4], index: 2, kind: input, shape index: {}]
  %s3 = inlined_call_operand.vmem [shape: f32[4,4], index: 3, kind: input, shape index: {}]
  %s4 = inlined_call_operand.vmem [shape: f32[1,4], index: 4, kind: input, shape index: {}]
  %s5 = inlined_call_operand.hbm [shape: f32[2,4,256], index: 5, kind: output, shape index: {}]
  %s6 = sld [smem:[#allocation0]]
  $region61: #{tpu_custom_call.1} parent=0
    _
  %s8 = ssub.s32 1, %s6
  %s9 = scalar_select 0, %s8, %s6
  $region1: #{tpu_custom_call.1} parent=0
    #allocation2 [shape = 'u8[8192]{0}', space=vmem, size = 0x2000, scoped, tag = 'input window, operand 0']
    #allocation3 [shape = 's32[2]{0}', space=sflag, size = 0x8, scoped, tag = 'scoped memory for tpu_custom_call.1']
    #allocation4 [shape = 's32[2]{0}', space=sflag, size = 0x8, scoped, tag = 'scoped memory for tpu_custom_call.1']
    #allocation5 [shape = 'u8[2048]{0}', space=vmem, size = 0x800, scoped, tag = 'input window, operand 1, single buffered']
    #allocation6 [shape = 's32[1]{0}', space=sflag, size = 0x4, scoped, tag = 'scoped memory for tpu_custom_call.1']
    #allocation7 [shape = 'u8[8192]{0}', space=vmem, size = 0x2000, scoped, tag = 'output window, operand 0']
    %10 = vsyncpa [#allocation3], 0
    %s11 = scalar_lea.sflag [#allocation3], 1
    %12 = vsyncpa %s11, 0
    %13 = vsyncpa [#allocation6], 0
    %14 = vsyncpa [#allocation4], 0
    %s15 = scalar_lea.sflag [#allocation4], 1
    %16 = vsyncpa %s15, 0
    loop: start=0, step=1, limit=4
    $region2: #{tpu_custom_call.1} parent=1 // loop_pre_header
      _
    $region3: #{tpu_custom_call.1} parent=1 // loop_header
      %s18 = sphi 0, %s22
      %p19 = scmp.ge.s32.totalorder %s18, 4
      %s28 = sphi 0, %s30
      %s31 = sphi 0, %s28
      %s32 = sphi 0, %s31
      %s48 = sphi 0, %s32
      %s52 = sphi 0, %s52
      %s54 = sphi 0, %s52
      %s55 = sphi 0, %s54
      %s69 = sphi 0, %s55
      %s73 = sphi 0, %s73
      %s75 = sphi 0, %s73
      %s76 = sphi 0, %s75
      %s90 = sphi 0, %s76
      %s94 = sphi 0, %s94
      %s96 = sphi 0, %s94
      %s97 = sphi 0, %s96
      %s111 = sphi 0, %s97
      %s115 = sphi 0, %s115
      %s117 = sphi 0, %s115
      %s118 = sphi 0, %s117
      %s132 = sphi 0, %s118
      %s138 = sphi 0, %s140
      %s141 = sphi 0, %s138
      %s142 = sphi 0, %s141
      %s158 = sphi 0, %s142
    $region4: #{tpu_custom_call.1} parent=1 // loop_header_branch
      %21 = sbr.rel (%p19) target = $region8
    $region5: #{tpu_custom_call.1} parent=1 // loop_body
      %s23 = ssub.s32 %s18, 1
      %s24 = ssub.s32 %s18, 2
      %s25 = sadd.s32 %s18, 1
      %s26 = ssub.s32 %s18, %s25
      %p27 = scmp.eq.s32.totalorder %s26, 0
      %s29 = sadd.s32 %s28, 1
      %s30 = scalar_select %p27, %s28, %s29
      %p33 = pneg %p27
      %p34 = scmp.eq.s32.totalorder %s18, 1
      %p35 = por %p33, %p34
      %p36 = scmp.ne.s32.totalorder %s28, %s31
      %p37 = scmp.eq.s32.totalorder %s18, 0
      %p38 = por %p36, %p37
      %p39 = scmp.ne.s32.totalorder %s28, %s31
      %p40 = scmp.eq.s32.totalorder %s23, 1
      %p41 = por %p39, %p40
      %p42 = scmp.ne.s32.totalorder %s31, %s32
      %p43 = scmp.eq.s32.totalorder %s23, 0
      %p44 = por %p42, %p43
      %p45 = scmp.ne.s32.totalorder %s31, %s32
      %p46 = scmp.eq.s32.totalorder %s24, 1
      %p47 = por %p45, %p46
      %p49 = scmp.ne.s32.totalorder %s32, %s48
      %p50 = scmp.eq.s32.totalorder %s24, 0
      %p51 = por %p49, %p50
      %s53 = sadd.s32 %s52, 1
      %p56 = scmp.eq.s32.totalorder %s18, 1
      %p57 = scmp.ne.s32.totalorder %s52, %s54
      %p58 = scmp.eq.s32.totalorder %s18, 0
      %p59 = por %p57, %p58
      %p60 = scmp.ne.s32.totalorder %s52, %s54
      %p61 = scmp.eq.s32.totalorder %s23, 1
      %p62 = por %p60, %p61
      %p63 = scmp.ne.s32.totalorder %s54, %s55
      %p64 = scmp.eq.s32.totalorder %s23, 0
      %p65 = por %p63, %p64
      %p66 = scmp.ne.s32.totalorder %s54, %s55
      %p67 = scmp.eq.s32.totalorder %s24, 1
      %p68 = por %p66, %p67
      %p70 = scmp.ne.s32.totalorder %s55, %s69
      %p71 = scmp.eq.s32.totalorder %s24, 0
      %p72 = por %p70, %p71
      %s74 = sadd.s32 %s73, 1
      %p77 = scmp.eq.s32.totalorder %s18, 1
      %p78 = scmp.ne.s32.totalorder %s73, %s75
      %p79 = scmp.eq.s32.totalorder %s18, 0
      %p80 = por %p78, %p79
      %p81 = scmp.ne.s32.totalorder %s73, %s75
      %p82 = scmp.eq.s32.totalorder %s23, 1
      %p83 = por %p81, %p82
      %p84 = scmp.ne.s32.totalorder %s75, %s76
      %p85 = scmp.eq.s32.totalorder %s23, 0
      %p86 = por %p84, %p85
      %p87 = scmp.ne.s32.totalorder %s75, %s76
      %p88 = scmp.eq.s32.totalorder %s24, 1
      %p89 = por %p87, %p88
      %p91 = scmp.ne.s32.totalorder %s76, %s90
      %p92 = scmp.eq.s32.totalorder %s24, 0
      %p93 = por %p91, %p92
      %s95 = sadd.s32 %s94, 1
      %p98 = scmp.eq.s32.totalorder %s18, 1
      %p99 = scmp.ne.s32.totalorder %s94, %s96
      %p100 = scmp.eq.s32.totalorder %s18, 0
      %p101 = por %p99, %p100
      %p102 = scmp.ne.s32.totalorder %s94, %s96
      %p103 = scmp.eq.s32.totalorder %s23, 1
      %p104 = por %p102, %p103
      %p105 = scmp.ne.s32.totalorder %s96, %s97
      %p106 = scmp.eq.s32.totalorder %s23, 0
      %p107 = por %p105, %p106
      %p108 = scmp.ne.s32.totalorder %s96, %s97
      %p109 = scmp.eq.s32.totalorder %s24, 1
      %p110 = por %p108, %p109
      %p112 = scmp.ne.s32.totalorder %s97, %s111
      %p113 = scmp.eq.s32.totalorder %s24, 0
      %p114 = por %p112, %p113
      %s116 = sadd.s32 %s115, 1
      %p119 = scmp.eq.s32.totalorder %s18, 1
      %p120 = scmp.ne.s32.totalorder %s115, %s117
      %p121 = scmp.eq.s32.totalorder %s18, 0
      %p122 = por %p120, %p121
      %p123 = scmp.ne.s32.totalorder %s115, %s117
      %p124 = scmp.eq.s32.totalorder %s23, 1
      %p125 = por %p123, %p124
      %p126 = scmp.ne.s32.totalorder %s117, %s118
      %p127 = scmp.eq.s32.totalorder %s23, 0
      %p128 = por %p126, %p127
      %p129 = scmp.ne.s32.totalorder %s117, %s118
      %p130 = scmp.eq.s32.totalorder %s24, 1
      %p131 = por %p129, %p130
      %p133 = scmp.ne.s32.totalorder %s118, %s132
      %p134 = scmp.eq.s32.totalorder %s24, 0
      %p135 = por %p133, %p134
      %s136 = ssub.s32 %s18, %s25
      %p137 = scmp.eq.s32.totalorder %s136, 0
      %s139 = sadd.s32 %s138, 1
      %s140 = scalar_select %p137, %s138, %s139
      %p143 = pneg %p137
      %p144 = scmp.eq.s32.totalorder %s18, 1
      %p145 = por %p143, %p144
      %p146 = scmp.ne.s32.totalorder %s138, %s141
      %p147 = scmp.eq.s32.totalorder %s18, 0
      %p148 = por %p146, %p147
      %p149 = scmp.ne.s32.totalorder %s138, %s141
      %p150 = scmp.eq.s32.totalorder %s23, 1
      %p151 = por %p149, %p150
      %p152 = scmp.ne.s32.totalorder %s141, %s142
      %p153 = scmp.eq.s32.totalorder %s23, 0
      %p154 = por %p152, %p153
      %p155 = scmp.ne.s32.totalorder %s141, %s142
      %p156 = scmp.eq.s32.totalorder %s24, 1
      %p157 = por %p155, %p156
      %p159 = scmp.ne.s32.totalorder %s142, %s158
      %p160 = scmp.eq.s32.totalorder %s24, 0
      %p161 = por %p159, %p160
      %p162 = scmp.le.s32.totalorder 1, %s18
      %p163 = scmp.lt.s32.totalorder %s18, 3
      %p164 = pnand %p162, %p163
      %p165 = pneg %p164
      // Predicated region
      $region9: #{tpu_custom_call.1} parent=5 // pred_check
        _
      $region10: #{tpu_custom_call.1} parent=5 // pred_check_branch
        %167 = sbr.rel (%p164) target = $region12
      $region11: #{tpu_custom_call.1} parent=5 // pred_region
        %s168 = ssub.s32 %s18, 1
        // Predicated region
        $region13: #{tpu_custom_call.1} parent=11 // pred_check
          %p169 = pneg %p65
        $region14: #{tpu_custom_call.1} parent=11 // pred_check_branch
          %171 = sbr.rel (%p169) target = $region16
        $region15: #{tpu_custom_call.1} parent=11 // pred_region
          %s173 = ssub.s32 64, 64
          %174 = vsyncadd [#allocation6], %s173
          %s176 = sshll.u32 [#allocation5], 4
          %s177 = int_to_ptr.vmem [resolvable:$true] %s176
          %179 = dma.hbm_to_vmem [thread:$0]  %s1, 64, %s177, [#allocation6]
        $region16: #{tpu_custom_call.1} parent=11 // pred_fallthru
          _
        // Predicated region
        $region17: #{tpu_custom_call.1} parent=11 // pred_check
          %p180 = pneg %p86
        $region18: #{tpu_custom_call.1} parent=11 // pred_check_branch
          %182 = sbr.rel (%p180) target = $region20
        $region19: #{tpu_custom_call.1} parent=11 // pred_region
          _
        $region20: #{tpu_custom_call.1} parent=11 // pred_fallthru
          _
        // Predicated region
        $region21: #{tpu_custom_call.1} parent=11 // pred_check
          %p183 = pneg %p107
        $region22: #{tpu_custom_call.1} parent=11 // pred_check_branch
          %185 = sbr.rel (%p183) target = $region24
        $region23: #{tpu_custom_call.1} parent=11 // pred_region
          _
        $region24: #{tpu_custom_call.1} parent=11 // pred_fallthru
          _
        // Predicated region
        $region25: #{tpu_custom_call.1} parent=11 // pred_check
          %p186 = pneg %p128
        $region26: #{tpu_custom_call.1} parent=11 // pred_check_branch
          %188 = sbr.rel (%p186) target = $region28
        $region27: #{tpu_custom_call.1} parent=11 // pred_region
          _
        $region28: #{tpu_custom_call.1} parent=11 // pred_fallthru
          _
      $region12: #{tpu_custom_call.1} parent=5 // pred_fallthru
        _
      %p189 = scmp.lt.s32.totalorder %s18, 2
      // Predicated region
      $region29: #{tpu_custom_call.1} parent=5 // pred_check
        %p190 = pneg %p189
      $region30: #{tpu_custom_call.1} parent=5 // pred_check_branch
        %192 = sbr.rel (%p190) target = $region32
      $region31: #{tpu_custom_call.1} parent=5 // pred_region
        // Predicated region
        $region33: #{tpu_custom_call.1} parent=31 // pred_check
          %p193 = pneg %p38
        $region34: #{tpu_custom_call.1} parent=31 // pred_check_branch
          %195 = sbr.rel (%p193) target = $region36
        $region35: #{tpu_custom_call.1} parent=31 // pred_region
          %s196 = sand.u32 %s28, 1
          %s197 = scalar_lea.sflag [#allocation3], %s196
          %s198 = sand.u32 %s28, 1
          %s199 = smul.addr %s198, 8
          %s200 = scalar_lea.vmem [#allocation2], %s199
          %s202 = ssub.s32 128, 128
          %203 = vsyncadd %s197, %s202
          %s204 = smul.addr %s18, 2
          %s205 = smul.addr %s204, 64
          %s206 = scalar_lea.hbm %s0, %s205
          %s208 = sshll.u32 %s200, 4
          %s209 = int_to_ptr.vmem [resolvable:$true] %s208
          %211 = dma.hbm_to_vmem [thread:$0]  %s206, 128, %s209, %s197
        $region36: #{tpu_custom_call.1} parent=31 // pred_fallthru
          _
      $region32: #{tpu_custom_call.1} parent=5 // pred_fallthru
        _
      %p212 = scmp.le.s32.totalorder 1, %s18
      %p213 = scmp.lt.s32.totalorder %s18, 3
      %p214 = pnand %p212, %p213
      %p215 = pneg %p214
      // Predicated region
      $region37: #{tpu_custom_call.1} parent=5 // pred_check
        _
      $region38: #{tpu_custom_call.1} parent=5 // pred_check_branch
        %217 = sbr.rel (%p214) target = $region40
      $region39: #{tpu_custom_call.1} parent=5 // pred_region
        %s218 = ssub.s32 %s18, 1
        %s219 = sand.u32 %s31, 1
        %s220 = scalar_lea.sflag [#allocation3], %s219
        %s221 = sand.u32 %s31, 1
        %s222 = smul.addr %s221, 8
        %s223 = scalar_lea.vmem [#allocation2], %s222
        // Predicated region
        $region41: #{tpu_custom_call.1} parent=39 // pred_check
          %p224 = pneg %p44
        $region42: #{tpu_custom_call.1} parent=39 // pred_check_branch
          %226 = sbr.rel (%p224) target = $region44
        $region43: #{tpu_custom_call.1} parent=39 // pred_region
          %227 = dma.done %s220, 128
        $region44: #{tpu_custom_call.1} parent=39 // pred_fallthru
          _
        // Predicated region
        $region45: #{tpu_custom_call.1} parent=39 // pred_check
          %p228 = pneg %p65
        $region46: #{tpu_custom_call.1} parent=39 // pred_check_branch
          %230 = sbr.rel (%p228) target = $region48
        $region47: #{tpu_custom_call.1} parent=39 // pred_region
          %231 = dma.done [#allocation6], 64
        $region48: #{tpu_custom_call.1} parent=39 // pred_fallthru
          _
        %s232 = sand.u32 %s31, 1
        %s233 = scalar_lea.sflag [#allocation3], %s232
        %s234 = sand.u32 %s31, 1
        %s235 = smul.addr %s234, 8
        %s236 = scalar_lea.vmem [#allocation2], %s235
        %p237 = pneg %p44
        %p238 = pneg %p41
        %p239 = pneg %p65
        %p240 = pneg %p62
        %p241 = pneg %p86
        %p242 = pneg %p83
        %p243 = pneg %p107
        %p244 = pneg %p104
        %p245 = pneg %p128
        %p246 = pneg %p125
        %p247 = pneg %p154
        %p248 = pneg %p151
        %s249 = sand.u32 %s141, 1
        %s250 = scalar_lea.sflag [#allocation4], %s249
        %s251 = sand.u32 %s141, 1
        %s252 = smul.addr %s251, 8
        %s253 = scalar_lea.vmem [#allocation7], %s252
        %v254 = vld [vmem:[%s223] sm:$0xff]
        %v256 = vcombine.high %v254, %v254
        %vm258 = vcmask 1043456
        %v259 = vsel %vm258, %v254, 0.0
        %v260 = vsel %vm258, %v256, 0.0
        %v261 = vadd.f32 %v259, %v260
        %262 = vadd.xlane.f32.xlu0 %v261
        %v263 = vpop.xlane.xlu0 %262
        %v264 = vmul.f32 %v263, 0.00390625
        %v265 = vld [vmem:[#allocation5] sm:$0xf]
        %v266 = vld [vmem:[%s2] sm:$0x1]
        %v268 = vlaneseq
        %v269 = vand.u32 %v268, 127
        %v270 = vlaneseq
        %v271 = vshrl.u32 %v270, 7
        %v272 = vsub.s32 %v269, %v271
        %v273 = vrot.slane %v264, %v272
        %vm274 = vcmask 31744
        %v275 = vsel %vm274, %v273, 0
        %v278 = vsel %vm258, %v265, 0
        %280 = vmatprep.subr.mxu0 0.0
        %281 = vmatpush1.msra.mxu0 0.0
        %282 = vmatprep.subr.mxu0 0.0
        %283 = vmatpush1.msra.mxu0 0.0
        %284 = vmatprep.subr.mxu0 0.0
        %285 = vmatpush1.msra.mxu0 0.0
        %286 = vmatprep.subr.mxu0 0.0
        %287 = vmatpush1.msra.mxu0 0.0
        %288 = vmatprep.subr.mxu0 0.0
        %289 = vmatpush1.msra.mxu0 0.0
        %290 = vmatprep.subr.mxu0 0.0
        %291 = vmatpush1.msra.mxu0 0.0
        %292 = vmatprep.subr.mxu0 0.0
        %293 = vmatpush1.msra.mxu0 0.0
        %294 = vmatprep.subr.mxu0 0.0
        %295 = vmatpush1.msra.mxu0 0.0
        %296 = vmatprep.subr.mxu0 0.0
        %297 = vmatpush1.msra.mxu0 0.0
        %298 = vmatprep.subr.mxu0 0.0
        %299 = vmatpush1.msra.mxu0 0.0
        %300 = vmatprep.subr.mxu0 0.0
        %301 = vmatpush1.msra.mxu0 0.0
        %302 = vmatprep.subr.mxu0 0.0
        %303 = vmatpush1.msra.mxu0 0.0
        %304 = vmatprep.subr.mxu0 0.0
        %305 = vmatpush1.msra.mxu0 0.0
        %306 = vmatprep.subr.mxu0 0.0
        %307 = vmatpush1.msra.mxu0 0.0
        %308 = vmatprep.subr.mxu0 0.0
        %309 = vmatpush1.msra.mxu0 0.0
        %310 = vmatprep.subr.mxu0 0.0
        %311 = vmatpush1.msra.mxu0 %v278
        %312 = vmatprep.subr.mxu0 0.0
        %313 = vmatpush2.msra.mxu0 0.0
        %314 = vmatprep.subr.mxu0 0.0
        %315 = vmatpush2.msra.mxu0 0.0
        %316 = vmatprep.subr.mxu0 0.0
        %317 = vmatpush2.msra.mxu0 0.0
        %318 = vmatprep.subr.mxu0 0.0
        %319 = vmatpush2.msra.mxu0 0.0
        %320 = vmatprep.subr.mxu0 0.0
        %321 = vmatpush2.msra.mxu0 0.0
        %322 = vmatprep.subr.mxu0 0.0
        %323 = vmatpush2.msra.mxu0 0.0
        %324 = vmatprep.subr.mxu0 0.0
        %325 = vmatpush2.msra.mxu0 0.0
        %326 = vmatprep.subr.mxu0 0.0
        %327 = vmatpush2.msra.mxu0 0.0
        %328 = vmatprep.subr.mxu0 0.0
        %329 = vmatpush2.msra.mxu0 0.0
        %330 = vmatprep.subr.mxu0 0.0
        %331 = vmatpush2.msra.mxu0 0.0
        %332 = vmatprep.subr.mxu0 0.0
        %333 = vmatpush2.msra.mxu0 0.0
        %334 = vmatprep.subr.mxu0 0.0
        %335 = vmatpush2.msra.mxu0 0.0
        %336 = vmatprep.subr.mxu0 0.0
        %337 = vmatpush2.msra.mxu0 0.0
        %338 = vmatprep.subr.mxu0 0.0
        %339 = vmatpush2.msra.mxu0 0.0
        %340 = vmatprep.subr.mxu0 0.0
        %341 = vmatpush2.msra.mxu0 0.0
        %342 = vmatprep.subr.mxu0 0.0
        %343 = vmatpush2.msra.mxu0 0.0
        %344 = vmatprep.mubr.f32.mxu0 0.0
        %345 = vmatmul.mubr.f32.gmra.mxu0 %v275
        %v346 = vpop.f32.mrf.mxu0
        %v347 = vadd.f32 %v266, %v346
        %v348 = vpop.f32.mrf.mxu0
        %349 = vdwg.mxu0
        %v350 = vmax.f32 %v347, 0.0
        %v351 = vld [vmem:[%s3] sm:$0xf]
        %v352 = vld [vmem:[%s4] sm:$0x1]
        %v354 = vsel %vm274, %v350, 0
        %v357 = vsel %vm258, %v351, 0
        %359 = vmatprep.subr.mxu0 0.0
        %360 = vmatpush1.msra.mxu0 0.0
        %361 = vmatprep.subr.mxu0 0.0
        %362 = vmatpush1.msra.mxu0 0.0
        %363 = vmatprep.subr.mxu0 0.0
        %364 = vmatpush1.msra.mxu0 0.0
        %365 = vmatprep.subr.mxu0 0.0
        %366 = vmatpush1.msra.mxu0 0.0
        %367 = vmatprep.subr.mxu0 0.0
        %368 = vmatpush1.msra.mxu0 0.0
        %369 = vmatprep.subr.mxu0 0.0
        %370 = vmatpush1.msra.mxu0 0.0
        %371 = vmatprep.subr.mxu0 0.0
        %372 = vmatpush1.msra.mxu0 0.0
        %373 = vmatprep.subr.mxu0 0.0
        %374 = vmatpush1.msra.mxu0 0.0
        %375 = vmatprep.subr.mxu0 0.0
        %376 = vmatpush1.msra.mxu0 0.0
        %377 = vmatprep.subr.mxu0 0.0
        %378 = vmatpush1.msra.mxu0 0.0
        %379 = vmatprep.subr.mxu0 0.0
        %380 = vmatpush1.msra.mxu0 0.0
        %381 = vmatprep.subr.mxu0 0.0
        %382 = vmatpush1.msra.mxu0 0.0
        %383 = vmatprep.subr.mxu0 0.0
        %384 = vmatpush1.msra.mxu0 0.0
        %385 = vmatprep.subr.mxu0 0.0
        %386 = vmatpush1.msra.mxu0 0.0
        %387 = vmatprep.subr.mxu0 0.0
        %388 = vmatpush1.msra.mxu0 0.0
        %389 = vmatprep.subr.mxu0 0.0
        %390 = vmatpush1.msra.mxu0 %v357
        %391 = vmatprep.subr.mxu0 0.0
        %392 = vmatpush2.msra.mxu0 0.0
        %393 = vmatprep.subr.mxu0 0.0
        %394 = vmatpush2.msra.mxu0 0.0
        %395 = vmatprep.subr.mxu0 0.0
        %396 = vmatpush2.msra.mxu0 0.0
        %397 = vmatprep.subr.mxu0 0.0
        %398 = vmatpush2.msra.mxu0 0.0
        %399 = vmatprep.subr.mxu0 0.0
        %400 = vmatpush2.msra.mxu0 0.0
        %401 = vmatprep.subr.mxu0 0.0
        %402 = vmatpush2.msra.mxu0 0.0
        %403 = vmatprep.subr.mxu0 0.0
        %404 = vmatpush2.msra.mxu0 0.0
        %405 = vmatprep.subr.mxu0 0.0
        %406 = vmatpush2.msra.mxu0 0.0
        %407 = vmatprep.subr.mxu0 0.0
        %408 = vmatpush2.msra.mxu0 0.0
        %409 = vmatprep.subr.mxu0 0.0
        %410 = vmatpush2.msra.mxu0 0.0
        %411 = vmatprep.subr.mxu0 0.0
        %412 = vmatpush2.msra.mxu0 0.0
        %413 = vmatprep.subr.mxu0 0.0
        %414 = vmatpush2.msra.mxu0 0.0
        %415 = vmatprep.subr.mxu0 0.0
        %416 = vmatpush2.msra.mxu0 0.0
        %417 = vmatprep.subr.mxu0 0.0
        %418 = vmatpush2.msra.mxu0 0.0
        %419 = vmatprep.subr.mxu0 0.0
        %420 = vmatpush2.msra.mxu0 0.0
        %421 = vmatprep.subr.mxu0 0.0
        %422 = vmatpush2.msra.mxu0 0.0
        %423 = vmatprep.mubr.f32.mxu0 0.0
        %424 = vmatmul.mubr.f32.gmra.mxu0 %v354
        %v425 = vpop.f32.mrf.mxu0
        %v426 = vadd.f32 %v352, %v425
        %v427 = vpop.f32.mrf.mxu0
        %428 = vdwg.mxu0
        %v429 = vxor.u32 %v426, 2147483648
        %v430 = vmul.f32 %v429, 1.442695
        %v431 = vpow.pop %v430
        %v432 = vadd.f32 %v431, 1.0
        %v433 = vrcp.pop %v432
        %v434 = vmul.f32 1.0, %v433
        %v435 = vlaneseq
        %v436 = vshrl.u32 %v435, 7
        %v437 = vsub.s32 0, %v436
        %v438 = vrot.slane %v434, %v437
        %440 = vbcast.lane.b32.xlu0 %v438, 256
        %v441 = vpop.permute.xlu0 %440
        %v444 = vunpack.c.l.s4 839922192
        %v445 = vunpack.c.0.s8 %v444
        %v446 = vlaneseq
        %v447 = vshrl.u32 %v446, 7
        %v448 = vsub.s32 %v445, %v447
        %v449 = vrot.slane %v441, %v448
        %v451 = vmul.f32 %v254, %v449
        %452 = vst [vmem:[%s253] sm:$0xff] %v451
        %s453 = sand.u32 %s141, 1
        %s454 = scalar_lea.sflag [#allocation4], %s453
        %s455 = sand.u32 %s141, 1
        %s456 = smul.addr %s455, 8
        %s457 = scalar_lea.vmem [#allocation7], %s456
        // Predicated region
        $region49: #{tpu_custom_call.1} parent=39 // pred_check
          %p458 = pneg %p151
        $region50: #{tpu_custom_call.1} parent=39 // pred_check_branch
          %460 = sbr.rel (%p458) target = $region52
        $region51: #{tpu_custom_call.1} parent=39 // pred_region
          %s462 = ssub.s32 128, 128
          %463 = vsyncadd %s454, %s462
          %s464 = smul.addr %s23, 2
          %s465 = smul.addr %s464, 64
          %s466 = scalar_lea.hbm %s5, %s465
          %s468 = sshll.u32 %s457, 4
          %s469 = int_to_ptr.vmem [resolvable:$true] %s468
          %471 = dma.vmem_to_hbm [thread:$0]  %s469, 128, %s466, %s454
        $region52: #{tpu_custom_call.1} parent=39 // pred_fallthru
          _
      $region40: #{tpu_custom_call.1} parent=5 // pred_fallthru
        _
      %p472 = scmp.le.s32.totalorder 2, %s18
      // Predicated region
      $region53: #{tpu_custom_call.1} parent=5 // pred_check
        %p473 = pneg %p472
      $region54: #{tpu_custom_call.1} parent=5 // pred_check_branch
        %475 = sbr.rel (%p473) target = $region56
      $region55: #{tpu_custom_call.1} parent=5 // pred_region
        %s476 = ssub.s32 %s18, 2
        // Predicated region
        $region57: #{tpu_custom_call.1} parent=55 // pred_check
          %p477 = pneg %p157
        $region58: #{tpu_custom_call.1} parent=55 // pred_check_branch
          %479 = sbr.rel (%p477) target = $region60
        $region59: #{tpu_custom_call.1} parent=55 // pred_region
          %s480 = sand.u32 %s142, 1
          %s481 = scalar_lea.sflag [#allocation4], %s480
          %s482 = sand.u32 %s142, 1
          %s483 = smul.addr %s482, 8
          %s484 = scalar_lea.vmem [#allocation7], %s483
          %485 = dma.done %s481, 128
        $region60: #{tpu_custom_call.1} parent=55 // pred_fallthru
          _
      $region56: #{tpu_custom_call.1} parent=5 // pred_fallthru
        _
    $region6: #{tpu_custom_call.1} parent=1 // loop_footer
      %s22 = sadd.s32 1, %s18
    $region7: #{tpu_custom_call.1} parent=1 // loop_footer_branch
      %17 = sbr.rel target = $region3
    $region8: #{tpu_custom_call.1} parent=1 // loop_exit
      _
    %486 = vsyncpa [#allocation3], 1
    %s487 = scalar_lea.sflag [#allocation3], 1
    %488 = vsyncpa %s487, 1
    %489 = vsyncpa [#allocation6], 1
    %490 = vsyncpa [#allocation4], 1
    %s491 = scalar_lea.sflag [#allocation4], 1
    %492 = vsyncpa %s491, 1

</llo_original>
